<compile_context>
chip_gen: v6e
topology: v6e:2x2x1
jax: 0.10.0
libtpu: 0.0.40
codegen_flags: <defaults>
</compile_context>

<pallas_src>
import functools

import jax
import jax.numpy as jnp
from jax import lax
from jax.experimental import pallas as pl
from jax.experimental.pallas import tpu as pltpu

_NORM_EPS = 1e-12   # F.normalize default eps (clamp_min on the L2 norm)
_EPS = 1e-07        # eps used in the loss denominator


def _mnrl_kernel(*refs, temperature, true_b, tile_b, num_neg, ragged):
    """One batch tile of the MNRL forward.

    refs = (a_ref, p_ref, n_ref_0 .. n_ref_{N-1}, o_ref)
      a_ref, p_ref, n_ref_i : (TB, D) VMEM tiles in the input dtype
      o_ref                 : (1, 1) SMEM block of the (num_tiles, 1) partial
                              per-tile loss sums (reduced in the wrapper).
    """
    a_ref, p_ref = refs[0], refs[1]
    n_refs = refs[2:2 + num_neg]
    o_ref = refs[2 + num_neg]

    inv_t = jnp.float32(1.0 / temperature)
    eps2 = jnp.float32(_NORM_EPS * _NORM_EPS)

    # The anchor is reused for the positive and every negative, so materialize
    # the normalized anchor once.  rsqrt lands on the EUP slot (cheap).
    a = a_ref[...].astype(jnp.float32)                               # (TB, D)
    a_hat = a * lax.rsqrt(
        jnp.maximum(jnp.sum(a * a, axis=-1, keepdims=True), eps2))   # (TB, D)

    def _cos_sim_over_t(x_ref):
        # Fused normalization: cos(a, x)/T = (a_hat . x) * rsqrt(||x||^2) / T
        # -- no normalized (TB, D) copy of x is ever materialized.
        x = x_ref[...].astype(jnp.float32)                           # (TB, D)
        dot = jnp.sum(a_hat * x, axis=-1, keepdims=True)             # (TB, 1)
        inv_n = lax.rsqrt(
            jnp.maximum(jnp.sum(x * x, axis=-1, keepdims=True), eps2))
        return dot * inv_n * inv_t                                   # (TB, 1)

    pos_sim = _cos_sim_over_t(p_ref)                                 # (TB, 1)

    exp_neg = jnp.zeros_like(pos_sim)                                # (TB, 1)
    for n_ref in n_refs:                                             # static unroll
        exp_neg = exp_neg + jnp.exp(_cos_sim_over_t(n_ref))

    exp_pos = jnp.exp(pos_sim)
    denom = exp_pos + exp_neg + jnp.float32(_EPS)
    # -log(exp_pos / denom) == log(denom) - pos_sim  (exact rewrite)
    loss = jnp.log(denom) - pos_sim                                  # (TB, 1)

    if ragged:
        # Remainder tile: rows >= true_b contain stale/OOB-padded data whose
        # exp/normalize may be Inf/NaN.  jnp.where (a select) does NOT
        # propagate values from the unselected branch, so zeroing here keeps
        # the reduction safe.  Do not remove this mask.
        rows = (lax.broadcasted_iota(jnp.int32, loss.shape, 0)
                + pl.program_id(0) * tile_b)
        loss = jnp.where(rows < true_b, loss, jnp.float32(0.0))

    o_ref[0, 0] = jnp.sum(loss)


def _vmem_budget_bytes():
    """Per-generation VMEM budget for input tiles + explicit scoped limit."""
    try:
        cap = int(pltpu.get_tpu_info().vmem_capacity_bytes)
    except Exception:
        cap = 64 * 1024 * 1024   # conservative fallback (v7x: 64 MiB per TC)
    budget = (cap * 3) // 4      # ~96 MiB on v5e/v6e, ~48 MiB on v7x
    limit = (cap * 7) // 8       # scoped-VMEM limit handed to Mosaic
    return budget, limit


def _choose_tile_b(batch, dim, operand_itemsizes, budget_bytes):
    """Largest batch tile whose double-buffered input blocks plus the live f32
    temporaries (normalized anchor + one streaming upcast + one product) fit
    the per-generation VMEM budget.  This kernel is HBM-bandwidth-bound, so
    bigger tiles == more of the roofline."""
    bytes_per_row = 2 * dim * sum(operand_itemsizes) + 3 * dim * 4
    tb = budget_bytes // max(bytes_per_row, 1)
    if tb >= batch:
        return batch                               # single tile, full batch
    # Align to native sublane packing of the narrowest dtype:
    # f32 -> 8 rows, bf16 -> 16 rows, int8/fp8 -> 32 rows.
    align = 8 * max(1, 4 // max(1, min(operand_itemsizes)))
    return max((tb // align) * align, align)


def multiple_negative_ranking_loss(anchor, positive, negative_list,
                                   temperature=0.1, block_rows=None):
    """JAX/Pallas equivalent of MultipleNegativeRankingLoss.forward.

    anchor, positive: (B, D); negative_list: list of (B, D) arrays.
    Inputs may be any float dtype (bf16 recommended -- upcast happens inside
    the kernel).  Returns a scalar f32 loss.
    """
    B, D = anchor.shape
    num_neg = len(negative_list)
    operands = [anchor, positive] + list(negative_list)
    itemsizes = [jnp.dtype(x.dtype).itemsize for x in operands]

    budget, vmem_limit = _vmem_budget_bytes()
    if block_rows is None:
        tile_b = _choose_tile_b(B, D, itemsizes, budget)
    else:
        tile_b = min(int(block_rows), B)
        if tile_b < B and tile_b % 8 != 0:         # (8, 128) sublane alignment
            tile_b = max((tile_b // 8) * 8, 8)
    num_tiles = pl.cdiv(B, tile_b)
    ragged = (B % tile_b) != 0

    kernel = functools.partial(
        _mnrl_kernel,
        temperature=float(temperature),
        true_b=B,
        tile_b=tile_b,
        num_neg=num_neg,
        ragged=ragged,
    )

    in_specs = [pl.BlockSpec((tile_b, D), lambda i: (i, 0))
                for _ in range(2 + num_neg)]
    # TODO(synk): on v5e/v6e (128 MiB VMEM), if xprof still shows exposed DMA
    # with many negative streams, add pipeline_mode=pl.Buffered(3) on the
    # negative-input BlockSpecs only (skip on v7x where VMEM binds).

    bytes_accessed = sum(x.size * jnp.dtype(x.dtype).itemsize
                         for x in operands) + int(num_tiles) * 4
    cost = pl.CostEstimate(
        flops=5 * (2 + num_neg) * B * D,
        transcendentals=(2 * (2 + num_neg) + 1) * B,
        bytes_accessed=bytes_accessed,
    )

    partial_sums = pl.pallas_call(
        kernel,
        out_shape=jax.ShapeDtypeStruct((num_tiles, 1), jnp.float32),
        grid=(num_tiles,),
        in_specs=in_specs,
        # Independent per-tile partial sums -> the grid axis is "parallel"
        # (on v7x Mosaic can shard tiles across both TensorCores).
        out_specs=pl.BlockSpec((1, 1), lambda i: (i, 0),
                               memory_space=pltpu.MemorySpace.SMEM),
        compiler_params=pltpu.CompilerParams(
            dimension_semantics=("parallel",),
            vmem_limit_bytes=int(vmem_limit)),
        cost_estimate=cost,
    )(*operands)

    return jnp.sum(partial_sums) / jnp.float32(B)


def _reference_loss(anchor, positive, negative_list, temperature=0.1):
    """Pure-JAX reference mirroring the PyTorch module exactly."""
    def normalize(x):
        n = jnp.sqrt(jnp.sum(x * x, axis=-1, keepdims=True))
        return x / jnp.maximum(n, _NORM_EPS)

    a = normalize(anchor.astype(jnp.float32))
    p = normalize(positive.astype(jnp.float32))
    if len(negative_list) > 0:
        n = normalize(jnp.stack(negative_list, axis=1).astype(jnp.float32))
        neg_sim = jnp.einsum("bd,bnd->bn", a, n) / temperature
        exp_neg = jnp.exp(neg_sim).sum(axis=-1)
    else:
        exp_neg = jnp.zeros((a.shape[0],), jnp.float32)
    pos_sim = jnp.sum(a * p, axis=-1) / temperature
    exp_pos = jnp.exp(pos_sim)
    loss = -jnp.log(exp_pos / (exp_pos + exp_neg + _EPS))
    return loss.mean()


if __name__ == "__main__":
    B, D, N_NEG = 16, 32, 3
    temperature = 0.1

    key = jax.random.PRNGKey(0)
    k_a, k_p, k_n = jax.random.split(key, 3)
    anchor = jax.random.normal(k_a, (B, D), dtype=jnp.float32)
    positive = jax.random.normal(k_p, (B, D), dtype=jnp.float32)
    negative_list = [jax.random.normal(k, (B, D), dtype=jnp.float32)
                     for k in jax.random.split(k_n, N_NEG)]

    # 1) default tiling (single tile for this small shape)
    loss = multiple_negative_ranking_loss(anchor, positive, negative_list,
                                          temperature=temperature)
    loss = jax.block_until_ready(loss)
    ref = _reference_loss(anchor, positive, negative_list,
                          temperature=temperature)
    assert jnp.allclose(loss, ref, rtol=1e-4, atol=1e-4), (loss, ref)

    # 2) multi-tile grid with a ragged remainder (B=20, TB=8 -> 3 tiles)
    B2 = 20
    a2 = jax.random.normal(jax.random.PRNGKey(1), (B2, D), dtype=jnp.float32)
    p2 = jax.random.normal(jax.random.PRNGKey(2), (B2, D), dtype=jnp.float32)
    n2 = [jax.random.normal(jax.random.PRNGKey(3 + i), (B2, D),
                            dtype=jnp.float32) for i in range(N_NEG)]
    loss2 = multiple_negative_ranking_loss(a2, p2, n2,
                                           temperature=temperature,
                                           block_rows=8)
    loss2 = jax.block_until_ready(loss2)
    ref2 = _reference_loss(a2, p2, n2, temperature=temperature)
    assert jnp.allclose(loss2, ref2, rtol=1e-4, atol=1e-4), (loss2, ref2)

    # 3) empty-negatives branch
    loss3 = multiple_negative_ranking_loss(anchor, positive, [],
                                           temperature=temperature)
    loss3 = jax.block_until_ready(loss3)
    ref3 = _reference_loss(anchor, positive, [], temperature=temperature)
    assert jnp.allclose(loss3, ref3, rtol=1e-4, atol=1e-4), (loss3, ref3)

    # 4) bf16 inputs stay bf16 in HBM/VMEM; upcast happens inside the kernel
    a_bf = anchor.astype(jnp.bfloat16)
    p_bf = positive.astype(jnp.bfloat16)
    n_bf = [n.astype(jnp.bfloat16) for n in negative_list]
    loss4 = multiple_negative_ranking_loss(a_bf, p_bf, n_bf,
                                           temperature=temperature)
    loss4 = jax.block_until_ready(loss4)
    ref4 = _reference_loss(a_bf, p_bf, n_bf, temperature=temperature)
    assert jnp.allclose(loss4, ref4, rtol=1e-3, atol=1e-3), (loss4, ref4)

    print("KERNEL_OK")
</pallas_src>

<mosaic_0001>
module attributes {stable_mosaic.version = 11 : i64} {
  func.func @_mnrl_kernel(%arg0: i32, %arg1: memref<16x32xf32, #tpu.memory_space<vmem>>, %arg2: memref<16x32xf32, #tpu.memory_space<vmem>>, %arg3: memref<16x32xf32, #tpu.memory_space<vmem>>, %arg4: memref<16x32xf32, #tpu.memory_space<vmem>>, %arg5: memref<16x32xf32, #tpu.memory_space<vmem>>, %arg6: memref<1x1xf32, #tpu.memory_space<smem>>) attributes {dimension_semantics = [#tpu.dimension_semantics<parallel>], iteration_bounds = array<i64: 1>, scalar_prefetch = 0 : i64, scratch_operands = 0 : i64, tpu.core_type = #tpu.core_type<tc>, window_params = [{transform_indices = @transform_0, window_bounds = array<i64: 16, 32>}, {transform_indices = @transform_1, window_bounds = array<i64: 16, 32>}, {transform_indices = @transform_2, window_bounds = array<i64: 16, 32>}, {transform_indices = @transform_3, window_bounds = array<i64: 16, 32>}, {transform_indices = @transform_4, window_bounds = array<i64: 16, 32>}, {transform_indices = @transform_5, window_bounds = array<i64: 1, 1>}]} {
    %c0 = arith.constant 0 : index
    %c0_0 = arith.constant 0 : index
    %0 = vector.load %arg1[%c0, %c0_0] : memref<16x32xf32, #tpu.memory_space<vmem>>, vector<16x32xf32>
    %1 = arith.mulf %0, %0 : vector<16x32xf32>
    %cst = arith.constant dense<0.000000e+00> : vector<16xf32>
    %2 = vector.multi_reduction <add>, %1, %cst [1] : vector<16x32xf32> to vector<16xf32>
    %3 = vector.shape_cast %2 : vector<16xf32> to vector<16x1xf32>
    %cst_1 = arith.constant 1.000000e-24 : f32
    %4 = vector.broadcast %cst_1 : f32 to vector<16x1xf32>
    %5 = arith.maximumf %3, %4 : vector<16x1xf32>
    %6 = math.rsqrt %5 : vector<16x1xf32>
    %7 = vector.broadcast %6 : vector<16x1xf32> to vector<16x32xf32>
    %8 = arith.mulf %0, %7 : vector<16x32xf32>
    %c0_2 = arith.constant 0 : index
    %c0_3 = arith.constant 0 : index
    %9 = vector.load %arg2[%c0_2, %c0_3] : memref<16x32xf32, #tpu.memory_space<vmem>>, vector<16x32xf32>
    %10 = arith.mulf %8, %9 : vector<16x32xf32>
    %cst_4 = arith.constant dense<0.000000e+00> : vector<16xf32>
    %11 = vector.multi_reduction <add>, %10, %cst_4 [1] : vector<16x32xf32> to vector<16xf32>
    %12 = vector.shape_cast %11 : vector<16xf32> to vector<16x1xf32>
    %13 = arith.mulf %9, %9 : vector<16x32xf32>
    %cst_5 = arith.constant dense<0.000000e+00> : vector<16xf32>
    %14 = vector.multi_reduction <add>, %13, %cst_5 [1] : vector<16x32xf32> to vector<16xf32>
    %15 = vector.shape_cast %14 : vector<16xf32> to vector<16x1xf32>
    %cst_6 = arith.constant 1.000000e-24 : f32
    %16 = vector.broadcast %cst_6 : f32 to vector<16x1xf32>
    %17 = arith.maximumf %15, %16 : vector<16x1xf32>
    %18 = math.rsqrt %17 : vector<16x1xf32>
    %19 = arith.mulf %12, %18 : vector<16x1xf32>
    %cst_7 = arith.constant 1.000000e+01 : f32
    %20 = vector.broadcast %cst_7 : f32 to vector<16x1xf32>
    %21 = arith.mulf %19, %20 : vector<16x1xf32>
    %cst_8 = arith.constant 0.000000e+00 : f32
    %22 = vector.broadcast %cst_8 : f32 to vector<16x1xf32>
    %c0_9 = arith.constant 0 : index
    %c0_10 = arith.constant 0 : index
    %23 = vector.load %arg3[%c0_9, %c0_10] : memref<16x32xf32, #tpu.memory_space<vmem>>, vector<16x32xf32>
    %24 = arith.mulf %8, %23 : vector<16x32xf32>
    %cst_11 = arith.constant dense<0.000000e+00> : vector<16xf32>
    %25 = vector.multi_reduction <add>, %24, %cst_11 [1] : vector<16x32xf32> to vector<16xf32>
    %26 = vector.shape_cast %25 : vector<16xf32> to vector<16x1xf32>
    %27 = arith.mulf %23, %23 : vector<16x32xf32>
    %cst_12 = arith.constant dense<0.000000e+00> : vector<16xf32>
    %28 = vector.multi_reduction <add>, %27, %cst_12 [1] : vector<16x32xf32> to vector<16xf32>
    %29 = vector.shape_cast %28 : vector<16xf32> to vector<16x1xf32>
    %cst_13 = arith.constant 1.000000e-24 : f32
    %30 = vector.broadcast %cst_13 : f32 to vector<16x1xf32>
    %31 = arith.maximumf %29, %30 : vector<16x1xf32>
    %32 = math.rsqrt %31 : vector<16x1xf32>
    %33 = arith.mulf %26, %32 : vector<16x1xf32>
    %cst_14 = arith.constant 1.000000e+01 : f32
    %34 = vector.broadcast %cst_14 : f32 to vector<16x1xf32>
    %35 = arith.mulf %33, %34 : vector<16x1xf32>
    %36 = math.exp %35 : vector<16x1xf32>
    %37 = arith.addf %22, %36 : vector<16x1xf32>
    %c0_15 = arith.constant 0 : index
    %c0_16 = arith.constant 0 : index
    %38 = vector.load %arg4[%c0_15, %c0_16] : memref<16x32xf32, #tpu.memory_space<vmem>>, vector<16x32xf32>
    %39 = arith.mulf %8, %38 : vector<16x32xf32>
    %cst_17 = arith.constant dense<0.000000e+00> : vector<16xf32>
    %40 = vector.multi_reduction <add>, %39, %cst_17 [1] : vector<16x32xf32> to vector<16xf32>
    %41 = vector.shape_cast %40 : vector<16xf32> to vector<16x1xf32>
    %42 = arith.mulf %38, %38 : vector<16x32xf32>
    %cst_18 = arith.constant dense<0.000000e+00> : vector<16xf32>
    %43 = vector.multi_reduction <add>, %42, %cst_18 [1] : vector<16x32xf32> to vector<16xf32>
    %44 = vector.shape_cast %43 : vector<16xf32> to vector<16x1xf32>
    %cst_19 = arith.constant 1.000000e-24 : f32
    %45 = vector.broadcast %cst_19 : f32 to vector<16x1xf32>
    %46 = arith.maximumf %44, %45 : vector<16x1xf32>
    %47 = math.rsqrt %46 : vector<16x1xf32>
    %48 = arith.mulf %41, %47 : vector<16x1xf32>
    %cst_20 = arith.constant 1.000000e+01 : f32
    %49 = vector.broadcast %cst_20 : f32 to vector<16x1xf32>
    %50 = arith.mulf %48, %49 : vector<16x1xf32>
    %51 = math.exp %50 : vector<16x1xf32>
    %52 = arith.addf %37, %51 : vector<16x1xf32>
    %c0_21 = arith.constant 0 : index
    %c0_22 = arith.constant 0 : index
    %53 = vector.load %arg5[%c0_21, %c0_22] : memref<16x32xf32, #tpu.memory_space<vmem>>, vector<16x32xf32>
    %54 = arith.mulf %8, %53 : vector<16x32xf32>
    %cst_23 = arith.constant dense<0.000000e+00> : vector<16xf32>
    %55 = vector.multi_reduction <add>, %54, %cst_23 [1] : vector<16x32xf32> to vector<16xf32>
    %56 = vector.shape_cast %55 : vector<16xf32> to vector<16x1xf32>
    %57 = arith.mulf %53, %53 : vector<16x32xf32>
    %cst_24 = arith.constant dense<0.000000e+00> : vector<16xf32>
    %58 = vector.multi_reduction <add>, %57, %cst_24 [1] : vector<16x32xf32> to vector<16xf32>
    %59 = vector.shape_cast %58 : vector<16xf32> to vector<16x1xf32>
    %cst_25 = arith.constant 1.000000e-24 : f32
    %60 = vector.broadcast %cst_25 : f32 to vector<16x1xf32>
    %61 = arith.maximumf %59, %60 : vector<16x1xf32>
    %62 = math.rsqrt %61 : vector<16x1xf32>
    %63 = arith.mulf %56, %62 : vector<16x1xf32>
    %cst_26 = arith.constant 1.000000e+01 : f32
    %64 = vector.broadcast %cst_26 : f32 to vector<16x1xf32>
    %65 = arith.mulf %63, %64 : vector<16x1xf32>
    %66 = math.exp %65 : vector<16x1xf32>
    %67 = arith.addf %52, %66 : vector<16x1xf32>
    %68 = math.exp %21 : vector<16x1xf32>
    %69 = arith.addf %68, %67 : vector<16x1xf32>
    %cst_27 = arith.constant 1.000000e-07 : f32
    %70 = vector.broadcast %cst_27 : f32 to vector<16x1xf32>
    %71 = arith.addf %69, %70 : vector<16x1xf32>
    %72 = math.log %71 : vector<16x1xf32>
    %73 = arith.subf %72, %21 : vector<16x1xf32>
    %74 = vector.shape_cast %73 : vector<16x1xf32> to vector<1x16x1xf32>
    %cst_28 = arith.constant dense<0.000000e+00> : vector<1xf32>
    %75 = vector.multi_reduction <add>, %74, %cst_28 [1, 2] : vector<1x16x1xf32> to vector<1xf32>
    %76 = vector.shape_cast %75 : vector<1xf32> to vector<1x1x1xf32>
    %77 = vector.extract %76[0, 0, 0] : f32 from vector<1x1x1xf32>
    %c0_29 = arith.constant 0 : index
    %c0_30 = arith.constant 0 : index
    %78 = memref.load %arg6[%c0_29, %c0_30] : memref<1x1xf32, #tpu.memory_space<smem>>
    memref.store %77, %arg6[%c0_29, %c0_30] : memref<1x1xf32, #tpu.memory_space<smem>>
    return
  }
  func.func @transform_0(%arg0: i32) -> (i32, i32) {
    %c0_i32 = arith.constant 0 : i32
    %c0_i32_0 = arith.constant 0 : i32
    return %arg0, %c0_i32 : i32, i32
  }
  func.func @transform_1(%arg0: i32) -> (i32, i32) {
    %c0_i32 = arith.constant 0 : i32
    %c0_i32_0 = arith.constant 0 : i32
    return %arg0, %c0_i32 : i32, i32
  }
  func.func @transform_2(%arg0: i32) -> (i32, i32) {
    %c0_i32 = arith.constant 0 : i32
    %c0_i32_0 = arith.constant 0 : i32
    return %arg0, %c0_i32 : i32, i32
  }
  func.func @transform_3(%arg0: i32) -> (i32, i32) {
    %c0_i32 = arith.constant 0 : i32
    %c0_i32_0 = arith.constant 0 : i32
    return %arg0, %c0_i32 : i32, i32
  }
  func.func @transform_4(%arg0: i32) -> (i32, i32) {
    %c0_i32 = arith.constant 0 : i32
    %c0_i32_0 = arith.constant 0 : i32
    return %arg0, %c0_i32 : i32, i32
  }
  func.func @transform_5(%arg0: i32) -> (i32, i32) {
    %c0_i32 = arith.constant 0 : i32
    %c0_i32_0 = arith.constant 0 : i32
    return %arg0, %c0_i32 : i32, i32
  }
}

</mosaic_0001>

<llo_original>
// kernel: tpu_custom_call.1
$region0: #{tpu_custom_call.1}
  #allocation0 [shape = 'u32[]', space=smem, size = 0x4, offset = 0x4, fixed_abs, tag = 'smem constant byte address 0x4 - core index']
  #allocation1 [shape = 'u32[144,128]{1,0:T(1,128)}', space=vmem, size = 0x12000, scoped, tag = 'internal scratch']
  %s0 = inlined_call_operand.hbm [shape: f32[16,32], index: 0, kind: input, shape index: {}]
  %s1 = inlined_call_operand.hbm [shape: f32[16,32], index: 1, kind: input, shape index: {}]
  %s2 = inlined_call_operand.hbm [shape: f32[16,32], index: 2, kind: input, shape index: {}]
  %s3 = inlined_call_operand.hbm [shape: f32[16,32], index: 3, kind: input, shape index: {}]
  %s4 = inlined_call_operand.hbm [shape: f32[16,32], index: 4, kind: input, shape index: {}]
  %s5 = inlined_call_operand.hbm [shape: f32[1,1], index: 5, kind: output, shape index: {}]
  %s6 = sld [smem:[#allocation0]]
  $region50: #{tpu_custom_call.1} parent=0
    _
  %s8 = ssub.s32 1, %s6
  %s9 = scalar_select 0, %s8, %s6
  $region1: #{tpu_custom_call.1} parent=0
    #allocation2 [shape = 'u8[8192]{0}', space=vmem, size = 0x2000, scoped, tag = 'input window, operand 0, single buffered']
    #allocation3 [shape = 's32[1]{0}', space=sflag, size = 0x4, scoped, tag = 'scoped memory for tpu_custom_call.1']
    #allocation4 [shape = 's32[1]{0}', space=sflag, size = 0x4, scoped, tag = 'scoped memory for tpu_custom_call.1']
    #allocation5 [shape = 'u8[8192]{0}', space=vmem, size = 0x2000, scoped, tag = 'input window, operand 1, single buffered']
    #allocation6 [shape = 's32[1]{0}', space=sflag, size = 0x4, scoped, tag = 'scoped memory for tpu_custom_call.1']
    #allocation7 [shape = 'u8[8192]{0}', space=vmem, size = 0x2000, scoped, tag = 'input window, operand 2, single buffered']
    #allocation8 [shape = 'u8[8192]{0}', space=vmem, size = 0x2000, scoped, tag = 'input window, operand 3, single buffered']
    #allocation9 [shape = 's32[1]{0}', space=sflag, size = 0x4, scoped, tag = 'scoped memory for tpu_custom_call.1']
    #allocation10 [shape = 'u8[8192]{0}', space=vmem, size = 0x2000, scoped, tag = 'input window, operand 4, single buffered']
    #allocation11 [shape = 'u8[512]{0}', space=smem, size = 0x200, scoped, tag = 'output window, operand 0, single buffered']
    %10 = vsyncpa [#allocation3], 0
    %11 = vsyncpa [#allocation6], 0
    %12 = vsyncpa [#allocation9], 0
    %13 = vsyncpa [#allocation4], 0
    // Predicated region
    $region2: #{tpu_custom_call.1} parent=1 // pred_check
      _
    $region3: #{tpu_custom_call.1} parent=1 // pred_check_branch
      %15 = sbr.rel (0) target = $region5
    $region4: #{tpu_custom_call.1} parent=1 // pred_region
      %s17 = ssub.s32 256, 256
      %18 = vsyncadd [#allocation3], %s17
      %s19 = sshll.u32 [#allocation2], 4
      %s20 = int_to_ptr.vmem [resolvable:$true] %s19
      %25 = dma.hbm_to_vmem [thread:$0]  %s0, 256, %s20, [#allocation3], 128, 128, 8
    $region5: #{tpu_custom_call.1} parent=1 // pred_fallthru
      _
    // Predicated region
    $region6: #{tpu_custom_call.1} parent=1 // pred_check
      _
    $region7: #{tpu_custom_call.1} parent=1 // pred_check_branch
      %27 = sbr.rel (0) target = $region9
    $region8: #{tpu_custom_call.1} parent=1 // pred_region
      %s29 = ssub.s32 256, 256
      %30 = vsyncadd [#allocation6], %s29
      %s31 = sshll.u32 [#allocation5], 4
      %s32 = int_to_ptr.vmem [resolvable:$true] %s31
      %37 = dma.hbm_to_vmem [thread:$0]  %s1, 256, %s32, [#allocation6], 128, 128, 8
    $region9: #{tpu_custom_call.1} parent=1 // pred_fallthru
      _
    // Predicated region
    $region10: #{tpu_custom_call.1} parent=1 // pred_check
      _
    $region11: #{tpu_custom_call.1} parent=1 // pred_check_branch
      %39 = sbr.rel (0) target = $region13
    $region12: #{tpu_custom_call.1} parent=1 // pred_region
      %s41 = ssub.s32 256, 256
      %42 = vsyncadd [#allocation6], %s41
      %s43 = sshll.u32 [#allocation7], 4
      %s44 = int_to_ptr.vmem [resolvable:$true] %s43
      %49 = dma.hbm_to_vmem [thread:$0]  %s2, 256, %s44, [#allocation6], 128, 128, 8
    $region13: #{tpu_custom_call.1} parent=1 // pred_fallthru
      _
    // Predicated region
    $region14: #{tpu_custom_call.1} parent=1 // pred_check
      _
    $region15: #{tpu_custom_call.1} parent=1 // pred_check_branch
      %51 = sbr.rel (0) target = $region17
    $region16: #{tpu_custom_call.1} parent=1 // pred_region
      %s53 = ssub.s32 256, 256
      %54 = vsyncadd [#allocation9], %s53
      %s55 = sshll.u32 [#allocation8], 4
      %s56 = int_to_ptr.vmem [resolvable:$true] %s55
      %61 = dma.hbm_to_vmem [thread:$0]  %s3, 256, %s56, [#allocation9], 128, 128, 8
    $region17: #{tpu_custom_call.1} parent=1 // pred_fallthru
      _
    // Predicated region
    $region18: #{tpu_custom_call.1} parent=1 // pred_check
      _
    $region19: #{tpu_custom_call.1} parent=1 // pred_check_branch
      %63 = sbr.rel (0) target = $region21
    $region20: #{tpu_custom_call.1} parent=1 // pred_region
      %s65 = ssub.s32 256, 256
      %66 = vsyncadd [#allocation9], %s65
      %s67 = sshll.u32 [#allocation10], 4
      %s68 = int_to_ptr.vmem [resolvable:$true] %s67
      %73 = dma.hbm_to_vmem [thread:$0]  %s4, 256, %s68, [#allocation9], 128, 128, 8
    $region21: #{tpu_custom_call.1} parent=1 // pred_fallthru
      _
    // Predicated region
    $region22: #{tpu_custom_call.1} parent=1 // pred_check
      _
    $region23: #{tpu_custom_call.1} parent=1 // pred_check_branch
      %75 = sbr.rel (0) target = $region25
    $region24: #{tpu_custom_call.1} parent=1 // pred_region
      %76 = dma.done [#allocation3], 256
    $region25: #{tpu_custom_call.1} parent=1 // pred_fallthru
      _
    // Predicated region
    $region26: #{tpu_custom_call.1} parent=1 // pred_check
      _
    $region27: #{tpu_custom_call.1} parent=1 // pred_check_branch
      %78 = sbr.rel (0) target = $region29
    $region28: #{tpu_custom_call.1} parent=1 // pred_region
      %79 = dma.done [#allocation6], 256
    $region29: #{tpu_custom_call.1} parent=1 // pred_fallthru
      _
    // Predicated region
    $region30: #{tpu_custom_call.1} parent=1 // pred_check
      _
    $region31: #{tpu_custom_call.1} parent=1 // pred_check_branch
      %81 = sbr.rel (0) target = $region33
    $region32: #{tpu_custom_call.1} parent=1 // pred_region
      %82 = dma.done [#allocation6], 256
    $region33: #{tpu_custom_call.1} parent=1 // pred_fallthru
      _
    // Predicated region
    $region34: #{tpu_custom_call.1} parent=1 // pred_check
      _
    $region35: #{tpu_custom_call.1} parent=1 // pred_check_branch
      %84 = sbr.rel (0) target = $region37
    $region36: #{tpu_custom_call.1} parent=1 // pred_region
      %85 = dma.done [#allocation9], 256
    $region37: #{tpu_custom_call.1} parent=1 // pred_fallthru
      _
    // Predicated region
    $region38: #{tpu_custom_call.1} parent=1 // pred_check
      _
    $region39: #{tpu_custom_call.1} parent=1 // pred_check_branch
      %87 = sbr.rel (0) target = $region41
    $region40: #{tpu_custom_call.1} parent=1 // pred_region
      %88 = dma.done [#allocation9], 256
    $region41: #{tpu_custom_call.1} parent=1 // pred_fallthru
      _
    %v89 = vld [vmem:[#allocation2] sm:$0xff]
    %v90 = vld [vmem:[#allocation2 + $0x8] sm:$0xff]
    %v91 = vmul.f32 %v89, %v89
    %v92 = vmul.f32 %v90, %v90
    %vm93 = vcmask 261120
    %v94 = vsel %vm93, %v91, 0.0
    %95 = vadd.xlane.f32.xlu0 %v94
    %v96 = vpop.xlane.xlu0 %95
    %v97 = vsel %vm93, %v92, 0.0
    %98 = vadd.xlane.f32.xlu0 %v97
    %v99 = vpop.xlane.xlu0 %98
    %v100 = vmax.f32 %v96, 1e-24
    %v101 = vmax.f32 %v99, 1e-24
    %v102 = vrsqrt.pop %v100
    %v103 = vrsqrt.pop %v101
    %v104 = vmul.f32 %v89, %v102
    %v105 = vmul.f32 %v90, %v103
    %v106 = vld [vmem:[#allocation5] sm:$0xff]
    %v107 = vld [vmem:[#allocation5 + $0x8] sm:$0xff]
    %v108 = vmul.f32 %v104, %v106
    %v109 = vmul.f32 %v105, %v107
    %v110 = vsel %vm93, %v108, 0.0
    %111 = vadd.xlane.f32.xlu0 %v110
    %v112 = vpop.xlane.xlu0 %111
    %v113 = vsel %vm93, %v109, 0.0
    %114 = vadd.xlane.f32.xlu0 %v113
    %v115 = vpop.xlane.xlu0 %114
    %v116 = vmul.f32 %v106, %v106
    %v117 = vmul.f32 %v107, %v107
    %v118 = vsel %vm93, %v116, 0.0
    %119 = vadd.xlane.f32.xlu0 %v118
    %v120 = vpop.xlane.xlu0 %119
    %v121 = vsel %vm93, %v117, 0.0
    %122 = vadd.xlane.f32.xlu0 %v121
    %v123 = vpop.xlane.xlu0 %122
    %v124 = vmax.f32 %v120, 1e-24
    %v125 = vmax.f32 %v123, 1e-24
    %v126 = vrsqrt.pop %v124
    %v127 = vrsqrt.pop %v125
    %v128 = vmul.f32 %v112, %v126
    %v129 = vmul.f32 %v115, %v127
    %v130 = vmul.f32 %v128, 10.0
    %v131 = vmul.f32 %v129, 10.0
    %v132 = vld [vmem:[#allocation7] sm:$0xff]
    %v133 = vld [vmem:[#allocation7 + $0x8] sm:$0xff]
    %v134 = vmul.f32 %v104, %v132
    %v135 = vmul.f32 %v105, %v133
    %v136 = vsel %vm93, %v134, 0.0
    %137 = vadd.xlane.f32.xlu0 %v136
    %v138 = vpop.xlane.xlu0 %137
    %v139 = vsel %vm93, %v135, 0.0
    %140 = vadd.xlane.f32.xlu0 %v139
    %v141 = vpop.xlane.xlu0 %140
    %v142 = vmul.f32 %v132, %v132
    %v143 = vmul.f32 %v133, %v133
    %v144 = vsel %vm93, %v142, 0.0
    %145 = vadd.xlane.f32.xlu0 %v144
    %v146 = vpop.xlane.xlu0 %145
    %v147 = vsel %vm93, %v143, 0.0
    %148 = vadd.xlane.f32.xlu0 %v147
    %v149 = vpop.xlane.xlu0 %148
    %v150 = vmax.f32 %v146, 1e-24
    %v151 = vmax.f32 %v149, 1e-24
    %v152 = vrsqrt.pop %v150
    %v153 = vrsqrt.pop %v151
    %v154 = vmul.f32 %v138, %v152
    %v155 = vmul.f32 %v141, %v153
    %v156 = vmul.f32 %v154, 10.0
    %v157 = vmul.f32 %v155, 10.0
    %v158 = vmul.f32 %v156, 1.442695
    %v159 = vpow.pop %v158
    %v160 = vmul.f32 %v157, 1.442695
    %v161 = vpow.pop %v160
    %v162 = vadd.f32 %v159, 0.0
    %v163 = vadd.f32 %v161, 0.0
    %v164 = vld [vmem:[#allocation8] sm:$0xff]
    %v165 = vld [vmem:[#allocation8 + $0x8] sm:$0xff]
    %v166 = vmul.f32 %v104, %v164
    %v167 = vmul.f32 %v105, %v165
    %v168 = vsel %vm93, %v166, 0.0
    %169 = vadd.xlane.f32.xlu0 %v168
    %v170 = vpop.xlane.xlu0 %169
    %v171 = vsel %vm93, %v167, 0.0
    %172 = vadd.xlane.f32.xlu0 %v171
    %v173 = vpop.xlane.xlu0 %172
    %v174 = vmul.f32 %v164, %v164
    %v175 = vmul.f32 %v165, %v165
    %v176 = vsel %vm93, %v174, 0.0
    %177 = vadd.xlane.f32.xlu0 %v176
    %v178 = vpop.xlane.xlu0 %177
    %v179 = vsel %vm93, %v175, 0.0
    %180 = vadd.xlane.f32.xlu0 %v179
    %v181 = vpop.xlane.xlu0 %180
    %v182 = vmax.f32 %v178, 1e-24
    %v183 = vmax.f32 %v181, 1e-24
    %v184 = vrsqrt.pop %v182
    %v185 = vrsqrt.pop %v183
    %v186 = vmul.f32 %v170, %v184
    %v187 = vmul.f32 %v173, %v185
    %v188 = vmul.f32 %v186, 10.0
    %v189 = vmul.f32 %v187, 10.0
    %v190 = vmul.f32 %v188, 1.442695
    %v191 = vpow.pop %v190
    %v192 = vmul.f32 %v189, 1.442695
    %v193 = vpow.pop %v192
    %v194 = vadd.f32 %v162, %v191
    %v195 = vadd.f32 %v163, %v193
    %v196 = vld [vmem:[#allocation10] sm:$0xff]
    %v197 = vld [vmem:[#allocation10 + $0x8] sm:$0xff]
    %v198 = vmul.f32 %v104, %v196
    %v199 = vmul.f32 %v105, %v197
    %v200 = vsel %vm93, %v198, 0.0
    %201 = vadd.xlane.f32.xlu0 %v200
    %v202 = vpop.xlane.xlu0 %201
    %v203 = vsel %vm93, %v199, 0.0
    %204 = vadd.xlane.f32.xlu0 %v203
    %v205 = vpop.xlane.xlu0 %204
    %v206 = vmul.f32 %v196, %v196
    %v207 = vmul.f32 %v197, %v197
    %v208 = vsel %vm93, %v206, 0.0
    %209 = vadd.xlane.f32.xlu0 %v208
    %v210 = vpop.xlane.xlu0 %209
    %v211 = vsel %vm93, %v207, 0.0
    %212 = vadd.xlane.f32.xlu0 %v211
    %v213 = vpop.xlane.xlu0 %212
    %v214 = vmax.f32 %v210, 1e-24
    %v215 = vmax.f32 %v213, 1e-24
    %v216 = vrsqrt.pop %v214
    %v217 = vrsqrt.pop %v215
    %v218 = vmul.f32 %v202, %v216
    %v219 = vmul.f32 %v205, %v217
    %v220 = vmul.f32 %v218, 10.0
    %v221 = vmul.f32 %v219, 10.0
    %v222 = vmul.f32 %v220, 1.442695
    %v223 = vpow.pop %v222
    %v224 = vmul.f32 %v221, 1.442695
    %v225 = vpow.pop %v224
    %v226 = vadd.f32 %v194, %v223
    %v227 = vadd.f32 %v195, %v225
    %v228 = vmul.f32 %v130, 1.442695
    %v229 = vpow.pop %v228
    %v230 = vmul.f32 %v131, 1.442695
    %v231 = vpow.pop %v230
    %v232 = vadd.f32 %v229, %v226
    %v233 = vadd.f32 %v231, %v227
    %v234 = vadd.f32 %v232, 1e-07
    %v235 = vadd.f32 %v233, 1e-07
    %v236 = vlog2.pop %v234
    %v237 = vmul.f32 %v236, 0.6931472
    %v238 = vlog2.pop %v235
    %v239 = vmul.f32 %v238, 0.6931472
    %v240 = vsub.f32 %v237, %v130
    %v241 = vsub.f32 %v239, %v131
    %vm242 = vcmask 7168
    %v243 = vsel %vm242, %v240, 0.0
    %v244 = vsel %vm242, %v241, 0.0
    %v245 = vadd.f32 %v243, %v244
    %246 = vadd.xlane.f32.xlu0 %v245
    %v247 = vpop.xlane.xlu0 %246
    %v248 = vrot.slane %v247, 4
    %v249 = vadd.f32 %v247, %v248
    %v250 = vrot.slane %v249, 2
    %v251 = vadd.f32 %v249, %v250
    %v252 = vrot.slane %v251, 1
    %v253 = vadd.f32 %v251, %v252
    %s254 = vtos %v253
    %s255 = scalar_lea.smem [#allocation11], 0
    %256 = sst [smem:[%s255]] %s254
    // Predicated region
    $region42: #{tpu_custom_call.1} parent=1 // pred_check
      _
    $region43: #{tpu_custom_call.1} parent=1 // pred_check_branch
      %258 = sbr.rel (0) target = $region45
    $region44: #{tpu_custom_call.1} parent=1 // pred_region
      %s260 = ssub.s32 16, 16
      %261 = vsyncadd [#allocation4], %s260
      %264 = dma.smem_to_hbm [#allocation11], 16, %s5, [#allocation4]
    $region45: #{tpu_custom_call.1} parent=1 // pred_fallthru
      _
    // Predicated region
    $region46: #{tpu_custom_call.1} parent=1 // pred_check
      _
    $region47: #{tpu_custom_call.1} parent=1 // pred_check_branch
      %266 = sbr.rel (0) target = $region49
    $region48: #{tpu_custom_call.1} parent=1 // pred_region
      %267 = dma.done [#allocation4], 16
    $region49: #{tpu_custom_call.1} parent=1 // pred_fallthru
      _
    %268 = sfence
    %269 = vsyncpa [#allocation3], 1
    %270 = vsyncpa [#allocation6], 1
    %271 = vsyncpa [#allocation9], 1
    %272 = vsyncpa [#allocation4], 1

</llo_original>
